<compile_context>
chip_gen: v7x
topology: tpu7x:2x2x1
jax: 0.10.0
libtpu: 0.0.40
codegen_flags: <defaults>
</compile_context>

<pallas_src>
from functools import partial
from typing import NamedTuple

import numpy as np
import jax
import jax.numpy as jnp
from jax.experimental import pallas as pl
from jax.experimental.pallas import tpu as pltpu

NEG_FILL = -1e30   # stands in for -inf padding (finite -> exp underflows to exactly 0)
LANE = 128


def _round_up(x, m):
    return ((x + m - 1) // m) * m


# ---------------- hierarchy constants (mirrors Hierarchy / module __init__) ------------
def build_hierarchy_constants(parents):
    parents = np.asarray(parents)
    n = len(parents)
    children = {}
    for j in range(1, n):
        children.setdefault(int(parents[j]), []).append(j)
    internal = sorted(children.keys())                     # internal_subset()
    cond_children = [children[i] for i in internal]
    cond_num_children = [len(c) for c in cond_children]
    K = max(cond_num_children)                             # max_num_children
    C = len(internal)                                      # num_internal
    E = n - 1                                              # one score per non-root node

    # bookkeeping used by the pure-JAX reference (mirrors HierCondLogSoftmax.__init__)
    row_index = np.concatenate([np.full(m, i) for i, m in enumerate(cond_num_children)])
    col_index = np.concatenate([np.arange(m) for m in cond_num_children])
    flat_index = row_index * K + col_index                 # (E,)
    child_index = np.concatenate(cond_children)            # (E,)

    # non-strict ancestor mask: M[i, j] = 1 iff i is an ancestor of j (incl. i == j, root)
    anc_of = np.zeros((n, n), dtype=bool)                  # anc_of[j, i]: i is ancestor of j
    anc_of[0, 0] = True
    for j in range(1, n):
        p = int(parents[j])
        anc_of[j, :] = anc_of[p, :]
        anc_of[j, j] = True
    M = anc_of.T.astype(np.float32)                        # (n, n)

    # slot-plane layout: plane k holds child-slot k of every internal node (lane padded).
    Cp = _round_up(max(C, 1), LANE)                        # lane-padded internal-node count
    Np = _round_up(n, LANE)                                # lane-padded output width
    gather_index = np.full((K, Cp), E, dtype=np.int32)     # E -> sentinel NEG_FILL column
    GM3 = np.zeros((K, Cp, Np), dtype=np.float32)          # padded slots keep all-zero rows
    t = 0
    for c, childs in enumerate(cond_children):
        for k, node in enumerate(childs):
            gather_index[k, c] = t                         # score column t <-> (node c, slot k)
            GM3[k, c, :n] = M[node, :]                     # fold gather + ancestor-sum into GM
            t += 1
    assert t == E

    return dict(num_nodes=n, num_scores=E, C=C, K=K, Cp=Cp, Np=Np,
                gather_index=gather_index, GM3=GM3,
                flat_index=flat_index, child_index=child_index, M=M)


# ---------------- hardware-aware VMEM budget --------------------------------------------
def _vmem_params():
    phys = 64 << 20
    cores = 1
    try:
        info = pltpu.get_tpu_info()
        phys = int(getattr(info, "vmem_capacity_bytes", phys) or phys)
        for name in ("num_cores", "core_count", "num_tensorcores", "tensorcore_count"):
            v = getattr(info, name, None)
            if v:
                cores = int(v)
                break
    except Exception:
        pass
    if phys >= (100 << 20):                 # v5e / v6e: 128 MiB VMEM per core
        return 92 << 20, 100 << 20, cores
    return 36 << 20, 50 << 20, cores        # v7x (64 MiB) and unknown parts: conservative


def _divs128(dim):
    d = dim // LANE
    return [m * LANE for m in range(d, 0, -1) if d % m == 0]


# ---------------- tile selection ---------------------------------------------------------
def _choose_config(B, K, Cp, Np, budget):
    """Pick (TB, TC, TN, use_cache).  Preference order: keep the batch tile big (full MXU
    rows, fewer GM re-streams), then a single N tile (softmax computed exactly once), then
    a tiled-N config with a VMEM log-prob cache, then plain recompute."""
    B8 = _round_up(max(B, 1), 8)
    tb0 = 8
    for t in (512, 256, 128, 64, 32, 16, 8):
        if _round_up(B8, t) - B8 <= B8 // 4:          # at most ~25% batch-padding waste
            tb0 = t
            break
    tb_cands = []
    t = tb0
    while t >= 8:
        tb_cands.append(t)
        t //= 2

    cdivs, ndivs = _divs128(Cp), _divs128(Np)

    def need(tb, tc, tn, cache):
        b = 4 * (2 * tb * K * tc + 2 * K * tc * tn + 3 * tb * tn)
        if cache:
            b += 4 * tb * K * Cp                       # packed log-prob cache (Cn, TB, K*TC)
        return b

    for cache_ok in (True, False):
        for tb in tb_cands:
            # (a) single N tile: no softmax recompute, no cache needed
            for tc in cdivs:
                if need(tb, tc, Np, False) <= budget:
                    return tb, tc, Np, False
            # (b) tiled N: cache the packed log-probs across N tiles when it fits
            for tn in (ndivs[1:] or ndivs):
                for tc in cdivs:
                    if need(tb, tc, tn, cache_ok) <= budget:
                        return tb, tc, tn, bool(cache_ok and tn < Np)
    raise ValueError(
        "hier_log_softmax: no tile configuration fits the VMEM budget "
        f"(K={K}, Cp={Cp}, Np={Np}, budget={budget} bytes). "
        "Consider bucketing internal nodes by child count to reduce K.")


# ---------------- fused Pallas kernel ----------------------------------------------------
def _make_kernel(K, TC, KTC, Nn, Cn, use_cache, gm_resident):
    def kernel(cs_ref, gm_ref, out_ref, acc_ref, *rest):
        ni = pl.program_id(1)
        ci = pl.program_id(2)

        @pl.when(ci == 0)
        def _init():
            acc_ref[...] = jnp.zeros_like(acc_ref)

        def packed_log_probs():
            cs = cs_ref[...]                                        # (TB, K*TC)
            xs = [cs[:, k * TC:(k + 1) * TC] for k in range(K)]     # K x (TB, TC) lane slices
            m = xs[0]
            for k in range(1, K):
                m = jnp.maximum(m, xs[k])
            s = jnp.exp(xs[0] - m)
            for k in range(1, K):
                s = s + jnp.exp(xs[k] - m)
            lse = m + jnp.log(s)                                    # (TB, TC)
            return cs - jnp.concatenate([lse] * K, axis=-1)         # (TB, K*TC)

        if use_cache:
            lp_ref = rest[0]                                        # (Cn, TB, K*TC)

            @pl.when(ni == 0)
            def _fill():
                lp_ref[ci] = packed_log_probs()

            lp = lp_ref[ci]
        else:
            lp = packed_log_probs()

        gm = gm_ref[ci * Nn + ni] if gm_resident else gm_ref[0]     # (K*TC, TN)

        # single MXU contraction over K*TC, accumulated in f32
        acc_ref[...] += jnp.dot(lp, gm, preferred_element_type=jnp.float32)

        @pl.when(ci == Cn - 1)
        def _fin():
            out_ref[...] = acc_ref[...].astype(out_ref.dtype)

    return kernel


# ---------------- host-side packing of the hierarchy constants ---------------------------
def _pack_constants(consts, TC, TN):
    K, Cp, Np = consts["K"], consts["Cp"], consts["Np"]
    Cn, Nn = Cp // TC, Np // TN
    KTC = K * TC
    # gather indices in packed column order:  col = j*K*TC + k*TC + r   (node c = j*TC + r)
    gi = consts["gather_index"].reshape(K, Cn, TC)
    gidx = np.transpose(gi, (1, 0, 2)).reshape(-1).astype(np.int32)          # (K*Cp,)
    # GM pre-tiled into (Cn*Nn, K*TC, TN) blocks matching the packed column order
    G = consts["GM3"].reshape(K, Cn, TC, Np)
    G = np.transpose(G, (1, 0, 2, 3)).reshape(Cn, KTC, Nn, TN)
    gm4 = np.transpose(G, (0, 2, 1, 3)).reshape(Cn * Nn, KTC, TN)
    # NOTE: GM entries are exactly 0/1; storing them in bf16 would halve traffic losslessly,
    # kept in f32 here to stay on the plain f32 MXU path for strict 1e-5 validation.
    return gidx, np.ascontiguousarray(gm4, dtype=np.float32)


class _Cfg(NamedTuple):
    B: int
    B_pad: int
    n: int
    K: int
    Cp: int
    Np: int
    TB: int
    TC: int
    TN: int
    use_cache: bool
    gm_resident: bool
    vmem_limit: int


# ---------------- jitted glue + pallas_call ----------------------------------------------
@partial(jax.jit, static_argnames=("cfg",))
def _run(scores, gidx, gm4, cfg):
    c = cfg
    KTC = c.K * c.TC
    Bn, Nn, Cn = c.B_pad // c.TB, c.Np // c.TN, c.Cp // c.TC

    # glue (fused by jit): append the NEG_FILL sentinel column, pad the batch, and gather
    # straight into the packed (B_pad, K*Cp) layout — no device transpose of the expanded data.
    x = scores.astype(jnp.float32)
    x = jnp.concatenate([x, jnp.full((x.shape[0], 1), NEG_FILL, jnp.float32)], axis=1)
    if c.B_pad > c.B:
        x = jnp.pad(x, ((0, c.B_pad - c.B), (0, 0)), constant_values=NEG_FILL)
    cs2 = jnp.take(x, gidx, axis=1)                                      # (B_pad, K*Cp)

    if c.gm_resident:
        gm_spec = pl.BlockSpec((Cn * Nn, KTC, c.TN), lambda bi, ni, ci: (0, 0, 0))
    else:
        gm_spec = pl.BlockSpec((1, KTC, c.TN), lambda bi, ni, ci: (ci * Nn + ni, 0, 0))

    scratch = [pltpu.VMEM((c.TB, c.TN), jnp.float32)]
    if c.use_cache:
        scratch.append(pltpu.VMEM((Cn, c.TB, KTC), jnp.float32))

    softmax_reps = 1 if (c.use_cache or Nn == 1) else Nn
    cost = pl.CostEstimate(
        flops=int(2 * c.B_pad * c.K * c.Cp * c.Np
                  + 6 * c.B_pad * c.K * c.Cp * softmax_reps),
        transcendentals=int((c.K + 1) * c.B_pad * c.Cp * softmax_reps),
        bytes_accessed=int(4 * (c.B_pad * c.K * c.Cp * Nn
                                + c.K * c.Cp * c.Np * (1 if c.gm_resident else Bn)
                                + c.B_pad * c.Np)),
    )

    out = pl.pallas_call(
        _make_kernel(c.K, c.TC, KTC, Nn, Cn, c.use_cache, c.gm_resident),
        out_shape=jax.ShapeDtypeStruct((c.B_pad, c.Np), jnp.float32),
        grid_spec=pltpu.PrefetchScalarGridSpec(
            num_scalar_prefetch=0,
            grid=(Bn, Nn, Cn),
            in_specs=[pl.BlockSpec((c.TB, KTC), lambda bi, ni, ci: (bi, ci)),
                      gm_spec],
            out_specs=pl.BlockSpec((c.TB, c.TN), lambda bi, ni, ci: (bi, ni)),
            scratch_shapes=scratch),
        compiler_params=pltpu.CompilerParams(
            dimension_semantics=("parallel",
                                 # the log-prob cache creates a cross-N-tile dependency,
                                 # so the N axis must stay on one core / in order
                                 "arbitrary" if c.use_cache else "parallel",
                                 "arbitrary"),
            vmem_limit_bytes=c.vmem_limit),
        cost_estimate=cost,
    )(cs2, gm4)
    return out[:c.B, :c.n]


# ---------------- public wrapper ----------------------------------------------------------
def hier_log_softmax(scores, consts, tile_override=None, allow_resident_gm=True):
    B, E = scores.shape
    n, K = consts["num_nodes"], consts["K"]
    Cp, Np = consts["Cp"], consts["Np"]
    assert E == consts["num_scores"] == n - 1

    budget, vmem_limit, cores = _vmem_params()

    if tile_override is not None:
        TB, TC, TN, use_cache = tile_override
        assert TB % 8 == 0 and Cp % TC == 0 and Np % TN == 0
    else:
        TB, TC, TN, use_cache = _choose_config(B, K, Cp, Np, budget)
        # multi-TensorCore parts (v7x): make sure the "parallel" grid axes have >= 2 blocks
        par_blocks = (_round_up(B, TB) // TB) * (1 if use_cache else Np // TN)
        if cores > 1 and par_blocks < 2 and TB >= 16:
            TB //= 2

    B_pad = _round_up(B, TB)
    KTC = K * TC
    Bn, Nn, Cn = B_pad // TB, Np // TN, Cp // TC

    # GM residency: worth it only when GM would otherwise be re-streamed per batch tile
    # and the whole folded matrix fits next to the per-step working set.
    gm_bytes = 4 * K * Cp * Np
    base = 4 * (2 * TB * KTC + 3 * TB * TN) + (4 * TB * K * Cp if use_cache else 0)
    gm_resident = bool(allow_resident_gm and Bn > 1 and Nn * Cn > 1
                       and base + 2 * gm_bytes <= budget)

    gidx, gm4 = _pack_constants(consts, TC, TN)
    cfg = _Cfg(B=B, B_pad=B_pad, n=n, K=K, Cp=Cp, Np=Np, TB=TB, TC=TC, TN=TN,
               use_cache=bool(use_cache), gm_resident=gm_resident,
               vmem_limit=int(vmem_limit))
    return _run(scores, jnp.asarray(gidx), jnp.asarray(gm4), cfg)


# ---------------- pure-JAX reference (mirrors the PyTorch forward) -----------------------
def reference(scores, consts):
    B, _ = scores.shape
    C, K, N = consts["C"], consts["K"], consts["num_nodes"]
    flat = jnp.full((B, C * K), -jnp.inf, dtype=jnp.float32)
    flat = flat.at[:, consts["flat_index"]].set(scores.astype(jnp.float32))
    clp = jax.nn.log_softmax(flat.reshape(B, C, K), axis=-1).reshape(B, C * K)
    log_cond_p = jnp.zeros((B, N), dtype=jnp.float32)
    log_cond_p = log_cond_p.at[:, consts["child_index"]].set(clp[:, consts["flat_index"]])
    return log_cond_p @ jnp.asarray(consts["M"])


if __name__ == "__main__":
    # deterministic ternary hierarchy: 500 nodes, 167 internal nodes (Cp=256), K=3, Np=512
    n = 500
    parents = np.concatenate([[-1], (np.arange(1, n) - 1) // 3])
    consts = build_hierarchy_constants(parents)

    B = 16
    E = consts["num_scores"]
    scores = jax.random.normal(jax.random.PRNGKey(0), (B, E), dtype=jnp.float32)
    ref = np.asarray(reference(scores, consts))

    # 1) auto-tiled config (typically a single N tile: softmax computed exactly once)
    out = jax.block_until_ready(hier_log_softmax(scores, consts))
    assert out.shape == (B, n)
    np.testing.assert_allclose(np.asarray(out), ref, rtol=1e-5, atol=1e-5)

    # 2) forced small tiles: exercises the tiled-N path with the VMEM log-prob cache,
    #    the C-reduction accumulator, and the resident-GM BlockSpec.
    out2 = jax.block_until_ready(
        hier_log_softmax(scores, consts, tile_override=(8, 128, 128, True)))
    np.testing.assert_allclose(np.asarray(out2), ref, rtol=1e-5, atol=1e-5)

    # 3) forced tiles, streamed GM, recompute path (no cache, N axis parallel).
    out3 = jax.block_until_ready(
        hier_log_softmax(scores, consts, tile_override=(8, 128, 256, False),
                         allow_resident_gm=False))
    np.testing.assert_allclose(np.asarray(out3), ref, rtol=1e-5, atol=1e-5)

    print("KERNEL_OK")
</pallas_src>

<mosaic_0001>
module attributes {stable_mosaic.version = 11 : i64} {
  func.func @kernel(%arg0: i32, %arg1: i32, %arg2: i32, %arg3: memref<16x768xf32, #tpu.memory_space<vmem>>, %arg4: memref<1x768x512xf32, #tpu.memory_space<vmem>>, %arg5: memref<16x512xf32, #tpu.memory_space<vmem>>, %arg6: memref<16x512xf32, #tpu.memory_space<vmem>>) attributes {dimension_semantics = [#tpu.dimension_semantics<parallel>, #tpu.dimension_semantics<parallel>, #tpu.dimension_semantics<arbitrary>], iteration_bounds = array<i64: 1, 1, 1>, scalar_prefetch = 0 : i64, scratch_operands = 1 : i64, tpu.core_type = #tpu.core_type<tc>, window_params = [{transform_indices = @transform_0, window_bounds = array<i64: 16, 768>}, {transform_indices = @transform_1, window_bounds = array<i64: 1, 768, 512>}, {transform_indices = @transform_2, window_bounds = array<i64: 16, 512>}]} {
    %c0_i32 = arith.constant 0 : i32
    %0 = arith.cmpi eq, %arg2, %c0_i32 : i32
    %1 = arith.extui %0 : i1 to i32
    %c0_i32_0 = arith.constant 0 : i32
    %2 = arith.cmpi ne, %1, %c0_i32_0 : i32
    scf.if %2 {
      %cst_11 = arith.constant 0.000000e+00 : f32
      %30 = vector.broadcast %cst_11 : f32 to vector<16x512xf32>
      %c0_12 = arith.constant 0 : index
      %c0_13 = arith.constant 0 : index
      %31 = vector.load %arg6[%c0_12, %c0_13] : memref<16x512xf32, #tpu.memory_space<vmem>>, vector<16x512xf32>
      tpu.vector_store %arg6[%c0_12, %c0_13], %30 {strides = array<i32>} : memref<16x512xf32, #tpu.memory_space<vmem>>, vector<16x512xf32>,
    } else {
    }
    %c0 = arith.constant 0 : index
    %c0_1 = arith.constant 0 : index
    %3 = vector.load %arg3[%c0, %c0_1] : memref<16x768xf32, #tpu.memory_space<vmem>>, vector<16x768xf32>
    %4 = vector.extract_strided_slice %3 {offsets = [0, 0], sizes = [16, 256], strides = [1, 1]} : vector<16x768xf32> to vector<16x256xf32>
    %5 = vector.extract_strided_slice %3 {offsets = [0, 256], sizes = [16, 256], strides = [1, 1]} : vector<16x768xf32> to vector<16x256xf32>
    %6 = vector.extract_strided_slice %3 {offsets = [0, 512], sizes = [16, 256], strides = [1, 1]} : vector<16x768xf32> to vector<16x256xf32>
    %7 = arith.maximumf %4, %5 : vector<16x256xf32>
    %8 = arith.maximumf %7, %6 : vector<16x256xf32>
    %9 = arith.subf %4, %8 : vector<16x256xf32>
    %10 = math.exp %9 : vector<16x256xf32>
    %11 = arith.subf %5, %8 : vector<16x256xf32>
    %12 = math.exp %11 : vector<16x256xf32>
    %13 = arith.addf %10, %12 : vector<16x256xf32>
    %14 = arith.subf %6, %8 : vector<16x256xf32>
    %15 = math.exp %14 : vector<16x256xf32>
    %16 = arith.addf %13, %15 : vector<16x256xf32>
    %17 = math.log %16 : vector<16x256xf32>
    %18 = arith.addf %8, %17 : vector<16x256xf32>
    %19 = tpu.concatenate %18, %18, %18 in 1 : vector<16x256xf32>, vector<16x256xf32>, vector<16x256xf32> -> vector<16x768xf32>
    %20 = arith.subf %3, %19 : vector<16x768xf32>
    %c0_2 = arith.constant 0 : index
    %c0_3 = arith.constant 0 : index
    %c0_4 = arith.constant 0 : index
    %21 = vector.load %arg4[%c0_2, %c0_3, %c0_4] : memref<1x768x512xf32, #tpu.memory_space<vmem>>, vector<1x768x512xf32>
    %22 = vector.shape_cast %21 : vector<1x768x512xf32> to vector<768x512xf32>
    %c0_5 = arith.constant 0 : index
    %c0_6 = arith.constant 0 : index
    %23 = vector.load %arg6[%c0_5, %c0_6] : memref<16x512xf32, #tpu.memory_space<vmem>>, vector<16x512xf32>
    %cst = arith.constant dense<0.000000e+00> : vector<16x512xf32>
    %24 = tpu.matmul %20, %22, %cst {dimension_numbers = #tpu.dot_dimension_numbers<[1], [0], [0], [1], [0, 0, 1, 1], [], []>} : vector<16x768xf32>, vector<768x512xf32>, vector<16x512xf32> -> vector<16x512xf32>
    %25 = arith.addf %23, %24 : vector<16x512xf32>
    %c0_7 = arith.constant 0 : index
    %c0_8 = arith.constant 0 : index
    %26 = vector.load %arg6[%c0_7, %c0_8] : memref<16x512xf32, #tpu.memory_space<vmem>>, vector<16x512xf32>
    tpu.vector_store %arg6[%c0_7, %c0_8], %25 {strides = array<i32>} : memref<16x512xf32, #tpu.memory_space<vmem>>, vector<16x512xf32>,
    %c0_i32_9 = arith.constant 0 : i32
    %27 = arith.cmpi eq, %arg2, %c0_i32_9 : i32
    %28 = arith.extui %27 : i1 to i32
    %c0_i32_10 = arith.constant 0 : i32
    %29 = arith.cmpi ne, %28, %c0_i32_10 : i32
    scf.if %29 {
      %c0_11 = arith.constant 0 : index
      %c0_12 = arith.constant 0 : index
      %30 = vector.load %arg6[%c0_11, %c0_12] : memref<16x512xf32, #tpu.memory_space<vmem>>, vector<16x512xf32>
      %c0_13 = arith.constant 0 : index
      %c0_14 = arith.constant 0 : index
      %31 = vector.load %arg5[%c0_13, %c0_14] : memref<16x512xf32, #tpu.memory_space<vmem>>, vector<16x512xf32>
      tpu.vector_store %arg5[%c0_13, %c0_14], %30 {strides = array<i32>} : memref<16x512xf32, #tpu.memory_space<vmem>>, vector<16x512xf32>,
    } else {
    }
    return
  }
  func.func @transform_0(%arg0: i32, %arg1: i32, %arg2: i32) -> (i32, i32) {
    %c0_i32 = arith.constant 0 : i32
    return %arg0, %arg2 : i32, i32
  }
  func.func @transform_1(%arg0: i32, %arg1: i32, %arg2: i32) -> (i32, i32, i32) {
    %c1_i32 = arith.constant 1 : i32
    %0 = arith.muli %arg2, %c1_i32 : i32
    %1 = arith.addi %0, %arg1 : i32
    %c0_i32 = arith.constant 0 : i32
    %c0_i32_0 = arith.constant 0 : i32
    %c0_i32_1 = arith.constant 0 : i32
    return %1, %c0_i32, %c0_i32_0 : i32, i32, i32
  }
  func.func @transform_2(%arg0: i32, %arg1: i32, %arg2: i32) -> (i32, i32) {
    %c0_i32 = arith.constant 0 : i32
    return %arg0, %arg1 : i32, i32
  }
}

</mosaic_0001>

<llo_original>
// kernel: _run.1
$region0: #{_run.1}
  #allocation0 [shape = 'u32[]', space=smem, size = 0x4, offset = 0x4, fixed_abs, tag = 'smem constant byte address 0x4 - core index']
  #allocation1 [shape = 'u32[144,128]{1,0:T(1,128)}', space=vmem, size = 0x12000, scoped, tag = 'internal scratch']
  #allocation2 [shape = 'f32[16,512]{1,0:T(8,128)}', space=vmem, size = 0x8000, scoped, tag = 'scratch operand']
  %s0 = inlined_call_operand.vmem [shape: f32[16,768], index: 0, kind: input, shape index: {}]
  %s1 = inlined_call_operand.vmem [shape: f32[1,768,512], index: 1, kind: input, shape index: {}]
  %s2 = inlined_call_operand.hbm [shape: f32[16,512], index: 2, kind: output, shape index: {}]
  %s3 = sld [smem:[#allocation0]]
  $region26: #{_run.1} parent=0
    _
  %s5 = ssub.s32 1, %s3
  %s6 = scalar_select 0, %s5, %s3
  $region1: #{_run.1} parent=0
    #allocation3 [shape = 'u8[32768]{0}', space=vmem, size = 0x8000, scoped, tag = 'output window, operand 0, single buffered']
    #allocation4 [shape = 's32[1]{0}', space=sflag, size = 0x4, scoped, tag = 'scoped memory for _run.1']
    %7 = vsyncpa [#allocation4], 0
    // Predicated region
    $region2: #{_run.1} parent=1 // pred_check
      _
    $region3: #{_run.1} parent=1 // pred_check_branch
      %9 = sbr.rel (0) target = $region5
    $region4: #{_run.1} parent=1 // pred_region
      _
    $region5: #{_run.1} parent=1 // pred_fallthru
      _
    // Predicated region
    $region6: #{_run.1} parent=1 // pred_check
      _
    $region7: #{_run.1} parent=1 // pred_check_branch
      %11 = sbr.rel (0) target = $region9
    $region8: #{_run.1} parent=1 // pred_region
      %s12 = sadd.s32 0, 0
      %p13 = scmp.lt.s32.totalorder %s12, 0
      %s14 = scalar_select %p13, %s12, 0
      %s15 = smul.addr %s14, 384
      %s16 = smul.addr %s15, 8
      %s17 = scalar_lea.vmem %s1, %s16
      %s18 = sadd.s32 0, 0
    $region9: #{_run.1} parent=1 // pred_fallthru
      _
    %s19 = sadd.s32 0, 0
    %p20 = scmp.lt.s32.totalorder %s19, 0
    %s21 = scalar_select %p20, %s19, 0
    %s22 = smul.addr %s21, 384
    %s23 = smul.addr %s22, 8
    %s24 = scalar_lea.vmem %s1, %s23
    %s25 = sadd.s32 0, 0
    %p26 = scmp.lt.s32.totalorder %s25, 0
    %s27 = scalar_select %p26, %s25, 0
    %s28 = smul.addr %s27, 384
    %s29 = smul.addr %s28, 8
    %s30 = scalar_lea.vmem %s1, %s29
    %s31 = sadd.s32 0, 0
    %p32 = scmp.eq.s32.totalorder 0, 0
    // Predicated region
    $region10: #{_run.1} parent=1 // pred_check
      %p33 = pneg %p32
    $region11: #{_run.1} parent=1 // pred_check_branch
      %35 = sbr.rel (%p33) target = $region13
    $region12: #{_run.1} parent=1 // pred_region
      %36 = vst [vmem:[#allocation2] sm:$0xff] 0.0
      %37 = vst [vmem:[#allocation2 + $0x8] sm:$0xff] 0.0
      %38 = vst [vmem:[#allocation2 + $0x10] sm:$0xff] 0.0
      %39 = vst [vmem:[#allocation2 + $0x18] sm:$0xff] 0.0
      %40 = vst [vmem:[#allocation2 + $0x20] sm:$0xff] 0.0
      %41 = vst [vmem:[#allocation2 + $0x28] sm:$0xff] 0.0
      %42 = vst [vmem:[#allocation2 + $0x30] sm:$0xff] 0.0
      %43 = vst [vmem:[#allocation2 + $0x38] sm:$0xff] 0.0
    $region13: #{_run.1} parent=1 // pred_fallthru
      _
    %v44 = vld [vmem:[%s0] sm:$0xff]
    %v45 = vld [vmem:[%s0 + $0x8] sm:$0xff]
    %v46 = vld [vmem:[%s0 + $0x10] sm:$0xff]
    %v47 = vld [vmem:[%s0 + $0x18] sm:$0xff]
    %v48 = vld [vmem:[%s0 + $0x20] sm:$0xff]
    %v49 = vld [vmem:[%s0 + $0x28] sm:$0xff]
    %v50 = vld [vmem:[%s0 + $0x30] sm:$0xff]
    %v51 = vld [vmem:[%s0 + $0x38] sm:$0xff]
    %v52 = vld [vmem:[%s0 + $0x40] sm:$0xff]
    %v53 = vld [vmem:[%s0 + $0x48] sm:$0xff]
    %v54 = vld [vmem:[%s0 + $0x50] sm:$0xff]
    %v55 = vld [vmem:[%s0 + $0x58] sm:$0xff]
    %v56 = vmax.f32 %v44, %v46
    %v57 = vmax.f32 %v45, %v47
    %v58 = vmax.f32 %v50, %v52
    %v59 = vmax.f32 %v51, %v53
    %v60 = vmax.f32 %v56, %v48
    %v61 = vmax.f32 %v57, %v49
    %v62 = vmax.f32 %v58, %v54
    %v63 = vmax.f32 %v59, %v55
    %v64 = vsub.f32 %v44, %v60
    %v65 = vsub.f32 %v45, %v61
    %v66 = vsub.f32 %v50, %v62
    %v67 = vsub.f32 %v51, %v63
    %v68 = vmul.f32 %v64, 1.442695
    %v69 = vpow.pop %v68
    %v70 = vmul.f32 %v65, 1.442695
    %v71 = vpow.pop %v70
    %v72 = vmul.f32 %v66, 1.442695
    %v73 = vpow.pop %v72
    %v74 = vmul.f32 %v67, 1.442695
    %v75 = vpow.pop %v74
    %v76 = vsub.f32 %v46, %v60
    %v77 = vsub.f32 %v47, %v61
    %v78 = vsub.f32 %v52, %v62
    %v79 = vsub.f32 %v53, %v63
    %v80 = vmul.f32 %v76, 1.442695
    %v81 = vpow.pop %v80
    %v82 = vmul.f32 %v77, 1.442695
    %v83 = vpow.pop %v82
    %v84 = vmul.f32 %v78, 1.442695
    %v85 = vpow.pop %v84
    %v86 = vmul.f32 %v79, 1.442695
    %v87 = vpow.pop %v86
    %v88 = vadd.f32 %v69, %v81
    %v89 = vadd.f32 %v71, %v83
    %v90 = vadd.f32 %v73, %v85
    %v91 = vadd.f32 %v75, %v87
    %v92 = vsub.f32 %v48, %v60
    %v93 = vsub.f32 %v49, %v61
    %v94 = vsub.f32 %v54, %v62
    %v95 = vsub.f32 %v55, %v63
    %v96 = vmul.f32 %v92, 1.442695
    %v97 = vpow.pop %v96
    %v98 = vmul.f32 %v93, 1.442695
    %v99 = vpow.pop %v98
    %v100 = vmul.f32 %v94, 1.442695
    %v101 = vpow.pop %v100
    %v102 = vmul.f32 %v95, 1.442695
    %v103 = vpow.pop %v102
    %v104 = vadd.f32 %v88, %v97
    %v105 = vadd.f32 %v89, %v99
    %v106 = vadd.f32 %v90, %v101
    %v107 = vadd.f32 %v91, %v103
    %v108 = vlog2.pop %v104
    %v109 = vmul.f32 %v108, 0.6931472
    %v110 = vlog2.pop %v105
    %v111 = vmul.f32 %v110, 0.6931472
    %v112 = vlog2.pop %v106
    %v113 = vmul.f32 %v112, 0.6931472
    %v114 = vlog2.pop %v107
    %v115 = vmul.f32 %v114, 0.6931472
    %v116 = vadd.f32 %v60, %v109
    %v117 = vadd.f32 %v61, %v111
    %v118 = vadd.f32 %v62, %v113
    %v119 = vadd.f32 %v63, %v115
    %v120 = vsub.f32 %v44, %v116
    %v121 = vsub.f32 %v45, %v117
    %v122 = vsub.f32 %v46, %v116
    %v123 = vsub.f32 %v47, %v117
    %v124 = vsub.f32 %v48, %v116
    %v125 = vsub.f32 %v49, %v117
    %v126 = vsub.f32 %v50, %v118
    %v127 = vsub.f32 %v51, %v119
    %v128 = vsub.f32 %v52, %v118
    %v129 = vsub.f32 %v53, %v119
    %v130 = vsub.f32 %v54, %v118
    %v131 = vsub.f32 %v55, %v119
    %v132 = vld [vmem:[%s30] sm:$0xff]
    %v133 = vld [vmem:[%s30 + $0x8] sm:$0xff]
    %v134 = vld [vmem:[%s30 + $0x10] sm:$0xff]
    %v135 = vld [vmem:[%s30 + $0x18] sm:$0xff]
    %v136 = vld [vmem:[%s30 + $0x20] sm:$0xff]
    %v137 = vld [vmem:[%s30 + $0x28] sm:$0xff]
    %v138 = vld [vmem:[%s30 + $0x30] sm:$0xff]
    %v139 = vld [vmem:[%s30 + $0x38] sm:$0xff]
    %v140 = vld [vmem:[%s30 + $0x40] sm:$0xff]
    %v141 = vld [vmem:[%s30 + $0x48] sm:$0xff]
    %v142 = vld [vmem:[%s30 + $0x50] sm:$0xff]
    %v143 = vld [vmem:[%s30 + $0x58] sm:$0xff]
    %v144 = vld [vmem:[%s30 + $0x60] sm:$0xff]
    %v145 = vld [vmem:[%s30 + $0x68] sm:$0xff]
    %v146 = vld [vmem:[%s30 + $0x70] sm:$0xff]
    %v147 = vld [vmem:[%s30 + $0x78] sm:$0xff]
    %v148 = vld [vmem:[%s30 + $0x80] sm:$0xff]
    %v149 = vld [vmem:[%s30 + $0x88] sm:$0xff]
    %v150 = vld [vmem:[%s30 + $0x90] sm:$0xff]
    %v151 = vld [vmem:[%s30 + $0x98] sm:$0xff]
    %v152 = vld [vmem:[%s30 + $0xa0] sm:$0xff]
    %v153 = vld [vmem:[%s30 + $0xa8] sm:$0xff]
    %v154 = vld [vmem:[%s30 + $0xb0] sm:$0xff]
    %v155 = vld [vmem:[%s30 + $0xb8] sm:$0xff]
    %v156 = vld [vmem:[%s30 + $0xc0] sm:$0xff]
    %v157 = vld [vmem:[%s30 + $0xc8] sm:$0xff]
    %v158 = vld [vmem:[%s30 + $0xd0] sm:$0xff]
    %v159 = vld [vmem:[%s30 + $0xd8] sm:$0xff]
    %v160 = vld [vmem:[%s30 + $0xe0] sm:$0xff]
    %v161 = vld [vmem:[%s30 + $0xe8] sm:$0xff]
    %v162 = vld [vmem:[%s30 + $0xf0] sm:$0xff]
    %v163 = vld [vmem:[%s30 + $0xf8] sm:$0xff]
    %v164 = vld [vmem:[%s30 + $0x100] sm:$0xff]
    %v165 = vld [vmem:[%s30 + $0x108] sm:$0xff]
    %v166 = vld [vmem:[%s30 + $0x110] sm:$0xff]
    %v167 = vld [vmem:[%s30 + $0x118] sm:$0xff]
    %v168 = vld [vmem:[%s30 + $0x120] sm:$0xff]
    %v169 = vld [vmem:[%s30 + $0x128] sm:$0xff]
    %v170 = vld [vmem:[%s30 + $0x130] sm:$0xff]
    %v171 = vld [vmem:[%s30 + $0x138] sm:$0xff]
    %v172 = vld [vmem:[%s30 + $0x140] sm:$0xff]
    %v173 = vld [vmem:[%s30 + $0x148] sm:$0xff]
    %v174 = vld [vmem:[%s30 + $0x150] sm:$0xff]
    %v175 = vld [vmem:[%s30 + $0x158] sm:$0xff]
    %v176 = vld [vmem:[%s30 + $0x160] sm:$0xff]
    %v177 = vld [vmem:[%s30 + $0x168] sm:$0xff]
    %v178 = vld [vmem:[%s30 + $0x170] sm:$0xff]
    %v179 = vld [vmem:[%s30 + $0x178] sm:$0xff]
    %v180 = vld [vmem:[%s30 + $0x180] sm:$0xff]
    %v181 = vld [vmem:[%s30 + $0x188] sm:$0xff]
    %v182 = vld [vmem:[%s30 + $0x190] sm:$0xff]
    %v183 = vld [vmem:[%s30 + $0x198] sm:$0xff]
    %v184 = vld [vmem:[%s30 + $0x1a0] sm:$0xff]
    %v185 = vld [vmem:[%s30 + $0x1a8] sm:$0xff]
    %v186 = vld [vmem:[%s30 + $0x1b0] sm:$0xff]
    %v187 = vld [vmem:[%s30 + $0x1b8] sm:$0xff]
    %v188 = vld [vmem:[%s30 + $0x1c0] sm:$0xff]
    %v189 = vld [vmem:[%s30 + $0x1c8] sm:$0xff]
    %v190 = vld [vmem:[%s30 + $0x1d0] sm:$0xff]
    %v191 = vld [vmem:[%s30 + $0x1d8] sm:$0xff]
    %v192 = vld [vmem:[%s30 + $0x1e0] sm:$0xff]
    %v193 = vld [vmem:[%s30 + $0x1e8] sm:$0xff]
    %v194 = vld [vmem:[%s30 + $0x1f0] sm:$0xff]
    %v195 = vld [vmem:[%s30 + $0x1f8] sm:$0xff]
    %v196 = vld [vmem:[%s30 + $0x200] sm:$0xff]
    %v197 = vld [vmem:[%s30 + $0x208] sm:$0xff]
    %v198 = vld [vmem:[%s30 + $0x210] sm:$0xff]
    %v199 = vld [vmem:[%s30 + $0x218] sm:$0xff]
    %v200 = vld [vmem:[%s30 + $0x220] sm:$0xff]
    %v201 = vld [vmem:[%s30 + $0x228] sm:$0xff]
    %v202 = vld [vmem:[%s30 + $0x230] sm:$0xff]
    %v203 = vld [vmem:[%s30 + $0x238] sm:$0xff]
    %v204 = vld [vmem:[%s30 + $0x240] sm:$0xff]
    %v205 = vld [vmem:[%s30 + $0x248] sm:$0xff]
    %v206 = vld [vmem:[%s30 + $0x250] sm:$0xff]
    %v207 = vld [vmem:[%s30 + $0x258] sm:$0xff]
    %v208 = vld [vmem:[%s30 + $0x260] sm:$0xff]
    %v209 = vld [vmem:[%s30 + $0x268] sm:$0xff]
    %v210 = vld [vmem:[%s30 + $0x270] sm:$0xff]
    %v211 = vld [vmem:[%s30 + $0x278] sm:$0xff]
    %v212 = vld [vmem:[%s30 + $0x280] sm:$0xff]
    %v213 = vld [vmem:[%s30 + $0x288] sm:$0xff]
    %v214 = vld [vmem:[%s30 + $0x290] sm:$0xff]
    %v215 = vld [vmem:[%s30 + $0x298] sm:$0xff]
    %v216 = vld [vmem:[%s30 + $0x2a0] sm:$0xff]
    %v217 = vld [vmem:[%s30 + $0x2a8] sm:$0xff]
    %v218 = vld [vmem:[%s30 + $0x2b0] sm:$0xff]
    %v219 = vld [vmem:[%s30 + $0x2b8] sm:$0xff]
    %v220 = vld [vmem:[%s30 + $0x2c0] sm:$0xff]
    %v221 = vld [vmem:[%s30 + $0x2c8] sm:$0xff]
    %v222 = vld [vmem:[%s30 + $0x2d0] sm:$0xff]
    %v223 = vld [vmem:[%s30 + $0x2d8] sm:$0xff]
    %v224 = vld [vmem:[%s30 + $0x2e0] sm:$0xff]
    %v225 = vld [vmem:[%s30 + $0x2e8] sm:$0xff]
    %v226 = vld [vmem:[%s30 + $0x2f0] sm:$0xff]
    %v227 = vld [vmem:[%s30 + $0x2f8] sm:$0xff]
    %v228 = vld [vmem:[%s30 + $0x300] sm:$0xff]
    %v229 = vld [vmem:[%s30 + $0x308] sm:$0xff]
    %v230 = vld [vmem:[%s30 + $0x310] sm:$0xff]
    %v231 = vld [vmem:[%s30 + $0x318] sm:$0xff]
    %v232 = vld [vmem:[%s30 + $0x320] sm:$0xff]
    %v233 = vld [vmem:[%s30 + $0x328] sm:$0xff]
    %v234 = vld [vmem:[%s30 + $0x330] sm:$0xff]
    %v235 = vld [vmem:[%s30 + $0x338] sm:$0xff]
    %v236 = vld [vmem:[%s30 + $0x340] sm:$0xff]
    %v237 = vld [vmem:[%s30 + $0x348] sm:$0xff]
    %v238 = vld [vmem:[%s30 + $0x350] sm:$0xff]
    %v239 = vld [vmem:[%s30 + $0x358] sm:$0xff]
    %v240 = vld [vmem:[%s30 + $0x360] sm:$0xff]
    %v241 = vld [vmem:[%s30 + $0x368] sm:$0xff]
    %v242 = vld [vmem:[%s30 + $0x370] sm:$0xff]
    %v243 = vld [vmem:[%s30 + $0x378] sm:$0xff]
    %v244 = vld [vmem:[%s30 + $0x380] sm:$0xff]
    %v245 = vld [vmem:[%s30 + $0x388] sm:$0xff]
    %v246 = vld [vmem:[%s30 + $0x390] sm:$0xff]
    %v247 = vld [vmem:[%s30 + $0x398] sm:$0xff]
    %v248 = vld [vmem:[%s30 + $0x3a0] sm:$0xff]
    %v249 = vld [vmem:[%s30 + $0x3a8] sm:$0xff]
    %v250 = vld [vmem:[%s30 + $0x3b0] sm:$0xff]
    %v251 = vld [vmem:[%s30 + $0x3b8] sm:$0xff]
    %v252 = vld [vmem:[%s30 + $0x3c0] sm:$0xff]
    %v253 = vld [vmem:[%s30 + $0x3c8] sm:$0xff]
    %v254 = vld [vmem:[%s30 + $0x3d0] sm:$0xff]
    %v255 = vld [vmem:[%s30 + $0x3d8] sm:$0xff]
    %v256 = vld [vmem:[%s30 + $0x3e0] sm:$0xff]
    %v257 = vld [vmem:[%s30 + $0x3e8] sm:$0xff]
    %v258 = vld [vmem:[%s30 + $0x3f0] sm:$0xff]
    %v259 = vld [vmem:[%s30 + $0x3f8] sm:$0xff]
    %v260 = vld [vmem:[%s30 + $0x400] sm:$0xff]
    %v261 = vld [vmem:[%s30 + $0x408] sm:$0xff]
    %v262 = vld [vmem:[%s30 + $0x410] sm:$0xff]
    %v263 = vld [vmem:[%s30 + $0x418] sm:$0xff]
    %v264 = vld [vmem:[%s30 + $0x420] sm:$0xff]
    %v265 = vld [vmem:[%s30 + $0x428] sm:$0xff]
    %v266 = vld [vmem:[%s30 + $0x430] sm:$0xff]
    %v267 = vld [vmem:[%s30 + $0x438] sm:$0xff]
    %v268 = vld [vmem:[%s30 + $0x440] sm:$0xff]
    %v269 = vld [vmem:[%s30 + $0x448] sm:$0xff]
    %v270 = vld [vmem:[%s30 + $0x450] sm:$0xff]
    %v271 = vld [vmem:[%s30 + $0x458] sm:$0xff]
    %v272 = vld [vmem:[%s30 + $0x460] sm:$0xff]
    %v273 = vld [vmem:[%s30 + $0x468] sm:$0xff]
    %v274 = vld [vmem:[%s30 + $0x470] sm:$0xff]
    %v275 = vld [vmem:[%s30 + $0x478] sm:$0xff]
    %v276 = vld [vmem:[%s30 + $0x480] sm:$0xff]
    %v277 = vld [vmem:[%s30 + $0x488] sm:$0xff]
    %v278 = vld [vmem:[%s30 + $0x490] sm:$0xff]
    %v279 = vld [vmem:[%s30 + $0x498] sm:$0xff]
    %v280 = vld [vmem:[%s30 + $0x4a0] sm:$0xff]
    %v281 = vld [vmem:[%s30 + $0x4a8] sm:$0xff]
    %v282 = vld [vmem:[%s30 + $0x4b0] sm:$0xff]
    %v283 = vld [vmem:[%s30 + $0x4b8] sm:$0xff]
    %v284 = vld [vmem:[%s30 + $0x4c0] sm:$0xff]
    %v285 = vld [vmem:[%s30 + $0x4c8] sm:$0xff]
    %v286 = vld [vmem:[%s30 + $0x4d0] sm:$0xff]
    %v287 = vld [vmem:[%s30 + $0x4d8] sm:$0xff]
    %v288 = vld [vmem:[%s30 + $0x4e0] sm:$0xff]
    %v289 = vld [vmem:[%s30 + $0x4e8] sm:$0xff]
    %v290 = vld [vmem:[%s30 + $0x4f0] sm:$0xff]
    %v291 = vld [vmem:[%s30 + $0x4f8] sm:$0xff]
    %v292 = vld [vmem:[%s30 + $0x500] sm:$0xff]
    %v293 = vld [vmem:[%s30 + $0x508] sm:$0xff]
    %v294 = vld [vmem:[%s30 + $0x510] sm:$0xff]
    %v295 = vld [vmem:[%s30 + $0x518] sm:$0xff]
    %v296 = vld [vmem:[%s30 + $0x520] sm:$0xff]
    %v297 = vld [vmem:[%s30 + $0x528] sm:$0xff]
    %v298 = vld [vmem:[%s30 + $0x530] sm:$0xff]
    %v299 = vld [vmem:[%s30 + $0x538] sm:$0xff]
    %v300 = vld [vmem:[%s30 + $0x540] sm:$0xff]
    %v301 = vld [vmem:[%s30 + $0x548] sm:$0xff]
    %v302 = vld [vmem:[%s30 + $0x550] sm:$0xff]
    %v303 = vld [vmem:[%s30 + $0x558] sm:$0xff]
    %v304 = vld [vmem:[%s30 + $0x560] sm:$0xff]
    %v305 = vld [vmem:[%s30 + $0x568] sm:$0xff]
    %v306 = vld [vmem:[%s30 + $0x570] sm:$0xff]
    %v307 = vld [vmem:[%s30 + $0x578] sm:$0xff]
    %v308 = vld [vmem:[%s30 + $0x580] sm:$0xff]
    %v309 = vld [vmem:[%s30 + $0x588] sm:$0xff]
    %v310 = vld [vmem:[%s30 + $0x590] sm:$0xff]
    %v311 = vld [vmem:[%s30 + $0x598] sm:$0xff]
    %v312 = vld [vmem:[%s30 + $0x5a0] sm:$0xff]
    %v313 = vld [vmem:[%s30 + $0x5a8] sm:$0xff]
    %v314 = vld [vmem:[%s30 + $0x5b0] sm:$0xff]
    %v315 = vld [vmem:[%s30 + $0x5b8] sm:$0xff]
    %v316 = vld [vmem:[%s30 + $0x5c0] sm:$0xff]
    %v317 = vld [vmem:[%s30 + $0x5c8] sm:$0xff]
    %v318 = vld [vmem:[%s30 + $0x5d0] sm:$0xff]
    %v319 = vld [vmem:[%s30 + $0x5d8] sm:$0xff]
    %v320 = vld [vmem:[%s30 + $0x5e0] sm:$0xff]
    %v321 = vld [vmem:[%s30 + $0x5e8] sm:$0xff]
    %v322 = vld [vmem:[%s30 + $0x5f0] sm:$0xff]
    %v323 = vld [vmem:[%s30 + $0x5f8] sm:$0xff]
    %v324 = vld [vmem:[%s30 + $0x600] sm:$0xff]
    %v325 = vld [vmem:[%s30 + $0x608] sm:$0xff]
    %v326 = vld [vmem:[%s30 + $0x610] sm:$0xff]
    %v327 = vld [vmem:[%s30 + $0x618] sm:$0xff]
    %v328 = vld [vmem:[%s30 + $0x620] sm:$0xff]
    %v329 = vld [vmem:[%s30 + $0x628] sm:$0xff]
    %v330 = vld [vmem:[%s30 + $0x630] sm:$0xff]
    %v331 = vld [vmem:[%s30 + $0x638] sm:$0xff]
    %v332 = vld [vmem:[%s30 + $0x640] sm:$0xff]
    %v333 = vld [vmem:[%s30 + $0x648] sm:$0xff]
    %v334 = vld [vmem:[%s30 + $0x650] sm:$0xff]
    %v335 = vld [vmem:[%s30 + $0x658] sm:$0xff]
    %v336 = vld [vmem:[%s30 + $0x660] sm:$0xff]
    %v337 = vld [vmem:[%s30 + $0x668] sm:$0xff]
    %v338 = vld [vmem:[%s30 + $0x670] sm:$0xff]
    %v339 = vld [vmem:[%s30 + $0x678] sm:$0xff]
    %v340 = vld [vmem:[%s30 + $0x680] sm:$0xff]
    %v341 = vld [vmem:[%s30 + $0x688] sm:$0xff]
    %v342 = vld [vmem:[%s30 + $0x690] sm:$0xff]
    %v343 = vld [vmem:[%s30 + $0x698] sm:$0xff]
    %v344 = vld [vmem:[%s30 + $0x6a0] sm:$0xff]
    %v345 = vld [vmem:[%s30 + $0x6a8] sm:$0xff]
    %v346 = vld [vmem:[%s30 + $0x6b0] sm:$0xff]
    %v347 = vld [vmem:[%s30 + $0x6b8] sm:$0xff]
    %v348 = vld [vmem:[%s30 + $0x6c0] sm:$0xff]
    %v349 = vld [vmem:[%s30 + $0x6c8] sm:$0xff]
    %v350 = vld [vmem:[%s30 + $0x6d0] sm:$0xff]
    %v351 = vld [vmem:[%s30 + $0x6d8] sm:$0xff]
    %v352 = vld [vmem:[%s30 + $0x6e0] sm:$0xff]
    %v353 = vld [vmem:[%s30 + $0x6e8] sm:$0xff]
    %v354 = vld [vmem:[%s30 + $0x6f0] sm:$0xff]
    %v355 = vld [vmem:[%s30 + $0x6f8] sm:$0xff]
    %v356 = vld [vmem:[%s30 + $0x700] sm:$0xff]
    %v357 = vld [vmem:[%s30 + $0x708] sm:$0xff]
    %v358 = vld [vmem:[%s30 + $0x710] sm:$0xff]
    %v359 = vld [vmem:[%s30 + $0x718] sm:$0xff]
    %v360 = vld [vmem:[%s30 + $0x720] sm:$0xff]
    %v361 = vld [vmem:[%s30 + $0x728] sm:$0xff]
    %v362 = vld [vmem:[%s30 + $0x730] sm:$0xff]
    %v363 = vld [vmem:[%s30 + $0x738] sm:$0xff]
    %v364 = vld [vmem:[%s30 + $0x740] sm:$0xff]
    %v365 = vld [vmem:[%s30 + $0x748] sm:$0xff]
    %v366 = vld [vmem:[%s30 + $0x750] sm:$0xff]
    %v367 = vld [vmem:[%s30 + $0x758] sm:$0xff]
    %v368 = vld [vmem:[%s30 + $0x760] sm:$0xff]
    %v369 = vld [vmem:[%s30 + $0x768] sm:$0xff]
    %v370 = vld [vmem:[%s30 + $0x770] sm:$0xff]
    %v371 = vld [vmem:[%s30 + $0x778] sm:$0xff]
    %v372 = vld [vmem:[%s30 + $0x780] sm:$0xff]
    %v373 = vld [vmem:[%s30 + $0x788] sm:$0xff]
    %v374 = vld [vmem:[%s30 + $0x790] sm:$0xff]
    %v375 = vld [vmem:[%s30 + $0x798] sm:$0xff]
    %v376 = vld [vmem:[%s30 + $0x7a0] sm:$0xff]
    %v377 = vld [vmem:[%s30 + $0x7a8] sm:$0xff]
    %v378 = vld [vmem:[%s30 + $0x7b0] sm:$0xff]
    %v379 = vld [vmem:[%s30 + $0x7b8] sm:$0xff]
    %v380 = vld [vmem:[%s30 + $0x7c0] sm:$0xff]
    %v381 = vld [vmem:[%s30 + $0x7c8] sm:$0xff]
    %v382 = vld [vmem:[%s30 + $0x7d0] sm:$0xff]
    %v383 = vld [vmem:[%s30 + $0x7d8] sm:$0xff]
    %v384 = vld [vmem:[%s30 + $0x7e0] sm:$0xff]
    %v385 = vld [vmem:[%s30 + $0x7e8] sm:$0xff]
    %v386 = vld [vmem:[%s30 + $0x7f0] sm:$0xff]
    %v387 = vld [vmem:[%s30 + $0x7f8] sm:$0xff]
    %v388 = vld [vmem:[%s30 + $0x800] sm:$0xff]
    %v389 = vld [vmem:[%s30 + $0x808] sm:$0xff]
    %v390 = vld [vmem:[%s30 + $0x810] sm:$0xff]
    %v391 = vld [vmem:[%s30 + $0x818] sm:$0xff]
    %v392 = vld [vmem:[%s30 + $0x820] sm:$0xff]
    %v393 = vld [vmem:[%s30 + $0x828] sm:$0xff]
    %v394 = vld [vmem:[%s30 + $0x830] sm:$0xff]
    %v395 = vld [vmem:[%s30 + $0x838] sm:$0xff]
    %v396 = vld [vmem:[%s30 + $0x840] sm:$0xff]
    %v397 = vld [vmem:[%s30 + $0x848] sm:$0xff]
    %v398 = vld [vmem:[%s30 + $0x850] sm:$0xff]
    %v399 = vld [vmem:[%s30 + $0x858] sm:$0xff]
    %v400 = vld [vmem:[%s30 + $0x860] sm:$0xff]
    %v401 = vld [vmem:[%s30 + $0x868] sm:$0xff]
    %v402 = vld [vmem:[%s30 + $0x870] sm:$0xff]
    %v403 = vld [vmem:[%s30 + $0x878] sm:$0xff]
    %v404 = vld [vmem:[%s30 + $0x880] sm:$0xff]
    %v405 = vld [vmem:[%s30 + $0x888] sm:$0xff]
    %v406 = vld [vmem:[%s30 + $0x890] sm:$0xff]
    %v407 = vld [vmem:[%s30 + $0x898] sm:$0xff]
    %v408 = vld [vmem:[%s30 + $0x8a0] sm:$0xff]
    %v409 = vld [vmem:[%s30 + $0x8a8] sm:$0xff]
    %v410 = vld [vmem:[%s30 + $0x8b0] sm:$0xff]
    %v411 = vld [vmem:[%s30 + $0x8b8] sm:$0xff]
    %v412 = vld [vmem:[%s30 + $0x8c0] sm:$0xff]
    %v413 = vld [vmem:[%s30 + $0x8c8] sm:$0xff]
    %v414 = vld [vmem:[%s30 + $0x8d0] sm:$0xff]
    %v415 = vld [vmem:[%s30 + $0x8d8] sm:$0xff]
    %v416 = vld [vmem:[%s30 + $0x8e0] sm:$0xff]
    %v417 = vld [vmem:[%s30 + $0x8e8] sm:$0xff]
    %v418 = vld [vmem:[%s30 + $0x8f0] sm:$0xff]
    %v419 = vld [vmem:[%s30 + $0x8f8] sm:$0xff]
    %v420 = vld [vmem:[%s30 + $0x900] sm:$0xff]
    %v421 = vld [vmem:[%s30 + $0x908] sm:$0xff]
    %v422 = vld [vmem:[%s30 + $0x910] sm:$0xff]
    %v423 = vld [vmem:[%s30 + $0x918] sm:$0xff]
    %v424 = vld [vmem:[%s30 + $0x920] sm:$0xff]
    %v425 = vld [vmem:[%s30 + $0x928] sm:$0xff]
    %v426 = vld [vmem:[%s30 + $0x930] sm:$0xff]
    %v427 = vld [vmem:[%s30 + $0x938] sm:$0xff]
    %v428 = vld [vmem:[%s30 + $0x940] sm:$0xff]
    %v429 = vld [vmem:[%s30 + $0x948] sm:$0xff]
    %v430 = vld [vmem:[%s30 + $0x950] sm:$0xff]
    %v431 = vld [vmem:[%s30 + $0x958] sm:$0xff]
    %v432 = vld [vmem:[%s30 + $0x960] sm:$0xff]
    %v433 = vld [vmem:[%s30 + $0x968] sm:$0xff]
    %v434 = vld [vmem:[%s30 + $0x970] sm:$0xff]
    %v435 = vld [vmem:[%s30 + $0x978] sm:$0xff]
    %v436 = vld [vmem:[%s30 + $0x980] sm:$0xff]
    %v437 = vld [vmem:[%s30 + $0x988] sm:$0xff]
    %v438 = vld [vmem:[%s30 + $0x990] sm:$0xff]
    %v439 = vld [vmem:[%s30 + $0x998] sm:$0xff]
    %v440 = vld [vmem:[%s30 + $0x9a0] sm:$0xff]
    %v441 = vld [vmem:[%s30 + $0x9a8] sm:$0xff]
    %v442 = vld [vmem:[%s30 + $0x9b0] sm:$0xff]
    %v443 = vld [vmem:[%s30 + $0x9b8] sm:$0xff]
    %v444 = vld [vmem:[%s30 + $0x9c0] sm:$0xff]
    %v445 = vld [vmem:[%s30 + $0x9c8] sm:$0xff]
    %v446 = vld [vmem:[%s30 + $0x9d0] sm:$0xff]
    %v447 = vld [vmem:[%s30 + $0x9d8] sm:$0xff]
    %v448 = vld [vmem:[%s30 + $0x9e0] sm:$0xff]
    %v449 = vld [vmem:[%s30 + $0x9e8] sm:$0xff]
    %v450 = vld [vmem:[%s30 + $0x9f0] sm:$0xff]
    %v451 = vld [vmem:[%s30 + $0x9f8] sm:$0xff]
    %v452 = vld [vmem:[%s30 + $0xa00] sm:$0xff]
    %v453 = vld [vmem:[%s30 + $0xa08] sm:$0xff]
    %v454 = vld [vmem:[%s30 + $0xa10] sm:$0xff]
    %v455 = vld [vmem:[%s30 + $0xa18] sm:$0xff]
    %v456 = vld [vmem:[%s30 + $0xa20] sm:$0xff]
    %v457 = vld [vmem:[%s30 + $0xa28] sm:$0xff]
    %v458 = vld [vmem:[%s30 + $0xa30] sm:$0xff]
    %v459 = vld [vmem:[%s30 + $0xa38] sm:$0xff]
    %v460 = vld [vmem:[%s30 + $0xa40] sm:$0xff]
    %v461 = vld [vmem:[%s30 + $0xa48] sm:$0xff]
    %v462 = vld [vmem:[%s30 + $0xa50] sm:$0xff]
    %v463 = vld [vmem:[%s30 + $0xa58] sm:$0xff]
    %v464 = vld [vmem:[%s30 + $0xa60] sm:$0xff]
    %v465 = vld [vmem:[%s30 + $0xa68] sm:$0xff]
    %v466 = vld [vmem:[%s30 + $0xa70] sm:$0xff]
    %v467 = vld [vmem:[%s30 + $0xa78] sm:$0xff]
    %v468 = vld [vmem:[%s30 + $0xa80] sm:$0xff]
    %v469 = vld [vmem:[%s30 + $0xa88] sm:$0xff]
    %v470 = vld [vmem:[%s30 + $0xa90] sm:$0xff]
    %v471 = vld [vmem:[%s30 + $0xa98] sm:$0xff]
    %v472 = vld [vmem:[%s30 + $0xaa0] sm:$0xff]
    %v473 = vld [vmem:[%s30 + $0xaa8] sm:$0xff]
    %v474 = vld [vmem:[%s30 + $0xab0] sm:$0xff]
    %v475 = vld [vmem:[%s30 + $0xab8] sm:$0xff]
    %v476 = vld [vmem:[%s30 + $0xac0] sm:$0xff]
    %v477 = vld [vmem:[%s30 + $0xac8] sm:$0xff]
    %v478 = vld [vmem:[%s30 + $0xad0] sm:$0xff]
    %v479 = vld [vmem:[%s30 + $0xad8] sm:$0xff]
    %v480 = vld [vmem:[%s30 + $0xae0] sm:$0xff]
    %v481 = vld [vmem:[%s30 + $0xae8] sm:$0xff]
    %v482 = vld [vmem:[%s30 + $0xaf0] sm:$0xff]
    %v483 = vld [vmem:[%s30 + $0xaf8] sm:$0xff]
    %v484 = vld [vmem:[%s30 + $0xb00] sm:$0xff]
    %v485 = vld [vmem:[%s30 + $0xb08] sm:$0xff]
    %v486 = vld [vmem:[%s30 + $0xb10] sm:$0xff]
    %v487 = vld [vmem:[%s30 + $0xb18] sm:$0xff]
    %v488 = vld [vmem:[%s30 + $0xb20] sm:$0xff]
    %v489 = vld [vmem:[%s30 + $0xb28] sm:$0xff]
    %v490 = vld [vmem:[%s30 + $0xb30] sm:$0xff]
    %v491 = vld [vmem:[%s30 + $0xb38] sm:$0xff]
    %v492 = vld [vmem:[%s30 + $0xb40] sm:$0xff]
    %v493 = vld [vmem:[%s30 + $0xb48] sm:$0xff]
    %v494 = vld [vmem:[%s30 + $0xb50] sm:$0xff]
    %v495 = vld [vmem:[%s30 + $0xb58] sm:$0xff]
    %v496 = vld [vmem:[%s30 + $0xb60] sm:$0xff]
    %v497 = vld [vmem:[%s30 + $0xb68] sm:$0xff]
    %v498 = vld [vmem:[%s30 + $0xb70] sm:$0xff]
    %v499 = vld [vmem:[%s30 + $0xb78] sm:$0xff]
    %v500 = vld [vmem:[%s30 + $0xb80] sm:$0xff]
    %v501 = vld [vmem:[%s30 + $0xb88] sm:$0xff]
    %v502 = vld [vmem:[%s30 + $0xb90] sm:$0xff]
    %v503 = vld [vmem:[%s30 + $0xb98] sm:$0xff]
    %v504 = vld [vmem:[%s30 + $0xba0] sm:$0xff]
    %v505 = vld [vmem:[%s30 + $0xba8] sm:$0xff]
    %v506 = vld [vmem:[%s30 + $0xbb0] sm:$0xff]
    %v507 = vld [vmem:[%s30 + $0xbb8] sm:$0xff]
    %v508 = vld [vmem:[%s30 + $0xbc0] sm:$0xff]
    %v509 = vld [vmem:[%s30 + $0xbc8] sm:$0xff]
    %v510 = vld [vmem:[%s30 + $0xbd0] sm:$0xff]
    %v511 = vld [vmem:[%s30 + $0xbd8] sm:$0xff]
    %v512 = vld [vmem:[%s30 + $0xbe0] sm:$0xff]
    %v513 = vld [vmem:[%s30 + $0xbe8] sm:$0xff]
    %v514 = vld [vmem:[%s30 + $0xbf0] sm:$0xff]
    %v515 = vld [vmem:[%s30 + $0xbf8] sm:$0xff]
    %v516 = vld [vmem:[#allocation2] sm:$0xff]
    %v517 = vld [vmem:[#allocation2 + $0x8] sm:$0xff]
    %v518 = vld [vmem:[#allocation2 + $0x10] sm:$0xff]
    %v519 = vld [vmem:[#allocation2 + $0x18] sm:$0xff]
    %v520 = vld [vmem:[#allocation2 + $0x20] sm:$0xff]
    %v521 = vld [vmem:[#allocation2 + $0x28] sm:$0xff]
    %v522 = vld [vmem:[#allocation2 + $0x30] sm:$0xff]
    %v523 = vld [vmem:[#allocation2 + $0x38] sm:$0xff]
    %524 = vmatprep.subr.mxu0 %v133
    %525 = vmatpush1.msra.mxu0 %v132
    %526 = vmatprep.subr.mxu0 %v137
    %527 = vmatpush1.msra.mxu0 %v136
    %528 = vmatprep.subr.mxu0 %v141
    %529 = vmatpush1.msra.mxu0 %v140
    %530 = vmatprep.subr.mxu0 %v145
    %531 = vmatpush1.msra.mxu0 %v144
    %532 = vmatprep.subr.mxu0 %v149
    %533 = vmatpush1.msra.mxu0 %v148
    %534 = vmatprep.subr.mxu0 %v153
    %535 = vmatpush1.msra.mxu0 %v152
    %536 = vmatprep.subr.mxu0 %v157
    %537 = vmatpush1.msra.mxu0 %v156
    %538 = vmatprep.subr.mxu0 %v161
    %539 = vmatpush1.msra.mxu0 %v160
    %540 = vmatprep.subr.mxu0 %v165
    %541 = vmatpush1.msra.mxu0 %v164
    %542 = vmatprep.subr.mxu0 %v169
    %543 = vmatpush1.msra.mxu0 %v168
    %544 = vmatprep.subr.mxu0 %v173
    %545 = vmatpush1.msra.mxu0 %v172
    %546 = vmatprep.subr.mxu0 %v177
    %547 = vmatpush1.msra.mxu0 %v176
    %548 = vmatprep.subr.mxu0 %v181
    %549 = vmatpush1.msra.mxu0 %v180
    %550 = vmatprep.subr.mxu0 %v185
    %551 = vmatpush1.msra.mxu0 %v184
    %552 = vmatprep.subr.mxu0 %v189
    %553 = vmatpush1.msra.mxu0 %v188
    %554 = vmatprep.subr.mxu0 %v193
    %555 = vmatpush1.msra.mxu0 %v192
    %556 = vmatprep.subr.mxu0 %v197
    %557 = vmatpush1.msra.mxu0 %v196
    %558 = vmatprep.subr.mxu0 %v201
    %559 = vmatpush1.msra.mxu0 %v200
    %560 = vmatprep.subr.mxu0 %v205
    %561 = vmatpush1.msra.mxu0 %v204
    %562 = vmatprep.subr.mxu0 %v209
    %563 = vmatpush1.msra.mxu0 %v208
    %564 = vmatprep.subr.mxu0 %v213
    %565 = vmatpush1.msra.mxu0 %v212
    %566 = vmatprep.subr.mxu0 %v217
    %567 = vmatpush1.msra.mxu0 %v216
    %568 = vmatprep.subr.mxu0 %v221
    %569 = vmatpush1.msra.mxu0 %v220
    %570 = vmatprep.subr.mxu0 %v225
    %571 = vmatpush1.msra.mxu0 %v224
    %572 = vmatprep.subr.mxu0 %v229
    %573 = vmatpush1.msra.mxu0 %v228
    %574 = vmatprep.subr.mxu0 %v233
    %575 = vmatpush1.msra.mxu0 %v232
    %576 = vmatprep.subr.mxu0 %v237
    %577 = vmatpush1.msra.mxu0 %v236
    %578 = vmatprep.subr.mxu0 %v241
    %579 = vmatpush1.msra.mxu0 %v240
    %580 = vmatprep.subr.mxu0 %v245
    %581 = vmatpush1.msra.mxu0 %v244
    %582 = vmatprep.subr.mxu0 %v249
    %583 = vmatpush1.msra.mxu0 %v248
    %584 = vmatprep.subr.mxu0 %v253
    %585 = vmatpush1.msra.mxu0 %v252
    %586 = vmatprep.subr.mxu0 %v257
    %587 = vmatpush1.msra.mxu0 %v256
    %588 = vmatprep.mubr.f32.mxu0 %v121
    %589 = vmatmul.mubr.f32.gmra.mrb[0].mxu0 %v120
    %v590 = vpop.f32.mrb[0].mxu0
    %v591 = vadd.f32 0.0, %v590
    %v592 = vpop.f32.mrb[0].mxu0
    %v593 = vadd.f32 0.0, %v592
    %594 = vmatprep.mubr.f32.mxu0 %v127
    %595 = vmatmul.mubr.f32.gmra.mrb[0].mxu0 %v126
    %v596 = vpop.f32.mrb[0].mxu0
    %v597 = vadd.f32 0.0, %v596
    %v598 = vpop.f32.mrb[0].mxu0
    %v599 = vadd.f32 0.0, %v598
    %600 = vdwg.mxu0
    %601 = vmatprep.subr.mxu0 %v261
    %602 = vmatpush1.msra.mxu0 %v260
    %603 = vmatprep.subr.mxu0 %v265
    %604 = vmatpush1.msra.mxu0 %v264
    %605 = vmatprep.subr.mxu0 %v269
    %606 = vmatpush1.msra.mxu0 %v268
    %607 = vmatprep.subr.mxu0 %v273
    %608 = vmatpush1.msra.mxu0 %v272
    %609 = vmatprep.subr.mxu0 %v277
    %610 = vmatpush1.msra.mxu0 %v276
    %611 = vmatprep.subr.mxu0 %v281
    %612 = vmatpush1.msra.mxu0 %v280
    %613 = vmatprep.subr.mxu0 %v285
    %614 = vmatpush1.msra.mxu0 %v284
    %615 = vmatprep.subr.mxu0 %v289
    %616 = vmatpush1.msra.mxu0 %v288
    %617 = vmatprep.subr.mxu0 %v293
    %618 = vmatpush1.msra.mxu0 %v292
    %619 = vmatprep.subr.mxu0 %v297
    %620 = vmatpush1.msra.mxu0 %v296
    %621 = vmatprep.subr.mxu0 %v301
    %622 = vmatpush1.msra.mxu0 %v300
    %623 = vmatprep.subr.mxu0 %v305
    %624 = vmatpush1.msra.mxu0 %v304
    %625 = vmatprep.subr.mxu0 %v309
    %626 = vmatpush1.msra.mxu0 %v308
    %627 = vmatprep.subr.mxu0 %v313
    %628 = vmatpush1.msra.mxu0 %v312
    %629 = vmatprep.subr.mxu0 %v317
    %630 = vmatpush1.msra.mxu0 %v316
    %631 = vmatprep.subr.mxu0 %v321
    %632 = vmatpush1.msra.mxu0 %v320
    %633 = vmatprep.subr.mxu0 %v325
    %634 = vmatpush1.msra.mxu0 %v324
    %635 = vmatprep.subr.mxu0 %v329
    %636 = vmatpush1.msra.mxu0 %v328
    %637 = vmatprep.subr.mxu0 %v333
    %638 = vmatpush1.msra.mxu0 %v332
    %639 = vmatprep.subr.mxu0 %v337
    %640 = vmatpush1.msra.mxu0 %v336
    %641 = vmatprep.subr.mxu0 %v341
    %642 = vmatpush1.msra.mxu0 %v340
    %643 = vmatprep.subr.mxu0 %v345
    %644 = vmatpush1.msra.mxu0 %v344
    %645 = vmatprep.subr.mxu0 %v349
    %646 = vmatpush1.msra.mxu0 %v348
    %647 = vmatprep.subr.mxu0 %v353
    %648 = vmatpush1.msra.mxu0 %v352
    %649 = vmatprep.subr.mxu0 %v357
    %650 = vmatpush1.msra.mxu0 %v356
    %651 = vmatprep.subr.mxu0 %v361
    %652 = vmatpush1.msra.mxu0 %v360
    %653 = vmatprep.subr.mxu0 %v365
    %654 = vmatpush1.msra.mxu0 %v364
    %655 = vmatprep.subr.mxu0 %v369
    %656 = vmatpush1.msra.mxu0 %v368
    %657 = vmatprep.subr.mxu0 %v373
    %658 = vmatpush1.msra.mxu0 %v372
    %659 = vmatprep.subr.mxu0 %v377
    %660 = vmatpush1.msra.mxu0 %v376
    %661 = vmatprep.subr.mxu0 %v381
    %662 = vmatpush1.msra.mxu0 %v380
    %663 = vmatprep.subr.mxu0 %v385
    %664 = vmatpush1.msra.mxu0 %v384
    %665 = vmatprep.mubr.f32.mxu0 %v123
    %666 = vmatmul.mubr.f32.gmra.mrb[0].mxu0 %v122
    %v667 = vpop.f32.mrb[0].mxu0
    %v668 = vadd.f32 %v591, %v667
    %v669 = vpop.f32.mrb[0].mxu0
    %v670 = vadd.f32 %v593, %v669
    %671 = vmatprep.mubr.f32.mxu0 %v129
    %672 = vmatmul.mubr.f32.gmra.mrb[0].mxu0 %v128
    %v673 = vpop.f32.mrb[0].mxu0
    %v674 = vadd.f32 %v597, %v673
    %v675 = vpop.f32.mrb[0].mxu0
    %v676 = vadd.f32 %v599, %v675
    %677 = vdwg.mxu0
    %678 = vmatprep.subr.mxu0 %v389
    %679 = vmatpush1.msra.mxu0 %v388
    %680 = vmatprep.subr.mxu0 %v393
    %681 = vmatpush1.msra.mxu0 %v392
    %682 = vmatprep.subr.mxu0 %v397
    %683 = vmatpush1.msra.mxu0 %v396
    %684 = vmatprep.subr.mxu0 %v401
    %685 = vmatpush1.msra.mxu0 %v400
    %686 = vmatprep.subr.mxu0 %v405
    %687 = vmatpush1.msra.mxu0 %v404
    %688 = vmatprep.subr.mxu0 %v409
    %689 = vmatpush1.msra.mxu0 %v408
    %690 = vmatprep.subr.mxu0 %v413
    %691 = vmatpush1.msra.mxu0 %v412
    %692 = vmatprep.subr.mxu0 %v417
    %693 = vmatpush1.msra.mxu0 %v416
    %694 = vmatprep.subr.mxu0 %v421
    %695 = vmatpush1.msra.mxu0 %v420
    %696 = vmatprep.subr.mxu0 %v425
    %697 = vmatpush1.msra.mxu0 %v424
    %698 = vmatprep.subr.mxu0 %v429
    %699 = vmatpush1.msra.mxu0 %v428
    %700 = vmatprep.subr.mxu0 %v433
    %701 = vmatpush1.msra.mxu0 %v432
    %702 = vmatprep.subr.mxu0 %v437
    %703 = vmatpush1.msra.mxu0 %v436
    %704 = vmatprep.subr.mxu0 %v441
    %705 = vmatpush1.msra.mxu0 %v440
    %706 = vmatprep.subr.mxu0 %v445
    %707 = vmatpush1.msra.mxu0 %v444
    %708 = vmatprep.subr.mxu0 %v449
    %709 = vmatpush1.msra.mxu0 %v448
    %710 = vmatprep.subr.mxu0 %v453
    %711 = vmatpush1.msra.mxu0 %v452
    %712 = vmatprep.subr.mxu0 %v457
    %713 = vmatpush1.msra.mxu0 %v456
    %714 = vmatprep.subr.mxu0 %v461
    %715 = vmatpush1.msra.mxu0 %v460
    %716 = vmatprep.subr.mxu0 %v465
    %717 = vmatpush1.msra.mxu0 %v464
    %718 = vmatprep.subr.mxu0 %v469
    %719 = vmatpush1.msra.mxu0 %v468
    %720 = vmatprep.subr.mxu0 %v473
    %721 = vmatpush1.msra.mxu0 %v472
    %722 = vmatprep.subr.mxu0 %v477
    %723 = vmatpush1.msra.mxu0 %v476
    %724 = vmatprep.subr.mxu0 %v481
    %725 = vmatpush1.msra.mxu0 %v480
    %726 = vmatprep.subr.mxu0 %v485
    %727 = vmatpush1.msra.mxu0 %v484
    %728 = vmatprep.subr.mxu0 %v489
    %729 = vmatpush1.msra.mxu0 %v488
    %730 = vmatprep.subr.mxu0 %v493
    %731 = vmatpush1.msra.mxu0 %v492
    %732 = vmatprep.subr.mxu0 %v497
    %733 = vmatpush1.msra.mxu0 %v496
    %734 = vmatprep.subr.mxu0 %v501
    %735 = vmatpush1.msra.mxu0 %v500
    %736 = vmatprep.subr.mxu0 %v505
    %737 = vmatpush1.msra.mxu0 %v504
    %738 = vmatprep.subr.mxu0 %v509
    %739 = vmatpush1.msra.mxu0 %v508
    %740 = vmatprep.subr.mxu0 %v513
    %741 = vmatpush1.msra.mxu0 %v512
    %742 = vmatprep.mubr.f32.mxu0 %v125
    %743 = vmatmul.mubr.f32.gmra.mrb[0].mxu0 %v124
    %v744 = vpop.f32.mrb[0].mxu0
    %v745 = vadd.f32 %v668, %v744
    %v746 = vpop.f32.mrb[0].mxu0
    %v747 = vadd.f32 %v670, %v746
    %748 = vmatprep.mubr.f32.mxu0 %v131
    %749 = vmatmul.mubr.f32.gmra.mrb[0].mxu0 %v130
    %v750 = vpop.f32.mrb[0].mxu0
    %v751 = vadd.f32 %v674, %v750
    %v752 = vpop.f32.mrb[0].mxu0
    %v753 = vadd.f32 %v676, %v752
    %754 = vdwg.mxu0
    %755 = vmatprep.subr.mxu0 %v135
    %756 = vmatpush1.msra.mxu0 %v134
    %757 = vmatprep.subr.mxu0 %v139
    %758 = vmatpush1.msra.mxu0 %v138
    %759 = vmatprep.subr.mxu0 %v143
    %760 = vmatpush1.msra.mxu0 %v142
    %761 = vmatprep.subr.mxu0 %v147
    %762 = vmatpush1.msra.mxu0 %v146
    %763 = vmatprep.subr.mxu0 %v151
    %764 = vmatpush1.msra.mxu0 %v150
    %765 = vmatprep.subr.mxu0 %v155
    %766 = vmatpush1.msra.mxu0 %v154
    %767 = vmatprep.subr.mxu0 %v159
    %768 = vmatpush1.msra.mxu0 %v158
    %769 = vmatprep.subr.mxu0 %v163
    %770 = vmatpush1.msra.mxu0 %v162
    %771 = vmatprep.subr.mxu0 %v167
    %772 = vmatpush1.msra.mxu0 %v166
    %773 = vmatprep.subr.mxu0 %v171
    %774 = vmatpush1.msra.mxu0 %v170
    %775 = vmatprep.subr.mxu0 %v175
    %776 = vmatpush1.msra.mxu0 %v174
    %777 = vmatprep.subr.mxu0 %v179
    %778 = vmatpush1.msra.mxu0 %v178
    %779 = vmatprep.subr.mxu0 %v183
    %780 = vmatpush1.msra.mxu0 %v182
    %781 = vmatprep.subr.mxu0 %v187
    %782 = vmatpush1.msra.mxu0 %v186
    %783 = vmatprep.subr.mxu0 %v191
    %784 = vmatpush1.msra.mxu0 %v190
    %785 = vmatprep.subr.mxu0 %v195
    %786 = vmatpush1.msra.mxu0 %v194
    %787 = vmatprep.subr.mxu0 %v199
    %788 = vmatpush1.msra.mxu0 %v198
    %789 = vmatprep.subr.mxu0 %v203
    %790 = vmatpush1.msra.mxu0 %v202
    %791 = vmatprep.subr.mxu0 %v207
    %792 = vmatpush1.msra.mxu0 %v206
    %793 = vmatprep.subr.mxu0 %v211
    %794 = vmatpush1.msra.mxu0 %v210
    %795 = vmatprep.subr.mxu0 %v215
    %796 = vmatpush1.msra.mxu0 %v214
    %797 = vmatprep.subr.mxu0 %v219
    %798 = vmatpush1.msra.mxu0 %v218
    %799 = vmatprep.subr.mxu0 %v223
    %800 = vmatpush1.msra.mxu0 %v222
    %801 = vmatprep.subr.mxu0 %v227
    %802 = vmatpush1.msra.mxu0 %v226
    %803 = vmatprep.subr.mxu0 %v231
    %804 = vmatpush1.msra.mxu0 %v230
    %805 = vmatprep.subr.mxu0 %v235
    %806 = vmatpush1.msra.mxu0 %v234
    %807 = vmatprep.subr.mxu0 %v239
    %808 = vmatpush1.msra.mxu0 %v238
    %809 = vmatprep.subr.mxu0 %v243
    %810 = vmatpush1.msra.mxu0 %v242
    %811 = vmatprep.subr.mxu0 %v247
    %812 = vmatpush1.msra.mxu0 %v246
    %813 = vmatprep.subr.mxu0 %v251
    %814 = vmatpush1.msra.mxu0 %v250
    %815 = vmatprep.subr.mxu0 %v255
    %816 = vmatpush1.msra.mxu0 %v254
    %817 = vmatprep.subr.mxu0 %v259
    %818 = vmatpush1.msra.mxu0 %v258
    %819 = vmatprep.mubr.f32.mxu0 %v121
    %820 = vmatmul.mubr.f32.gmra.mrb[0].mxu0 %v120
    %v821 = vpop.f32.mrb[0].mxu0
    %v822 = vadd.f32 0.0, %v821
    %v823 = vpop.f32.mrb[0].mxu0
    %v824 = vadd.f32 0.0, %v823
    %825 = vmatprep.mubr.f32.mxu0 %v127
    %826 = vmatmul.mubr.f32.gmra.mrb[0].mxu0 %v126
    %v827 = vpop.f32.mrb[0].mxu0
    %v828 = vadd.f32 0.0, %v827
    %v829 = vpop.f32.mrb[0].mxu0
    %v830 = vadd.f32 0.0, %v829
    %831 = vdwg.mxu0
    %832 = vmatprep.subr.mxu0 %v263
    %833 = vmatpush1.msra.mxu0 %v262
    %834 = vmatprep.subr.mxu0 %v267
    %835 = vmatpush1.msra.mxu0 %v266
    %836 = vmatprep.subr.mxu0 %v271
    %837 = vmatpush1.msra.mxu0 %v270
    %838 = vmatprep.subr.mxu0 %v275
    %839 = vmatpush1.msra.mxu0 %v274
    %840 = vmatprep.subr.mxu0 %v279
    %841 = vmatpush1.msra.mxu0 %v278
    %842 = vmatprep.subr.mxu0 %v283
    %843 = vmatpush1.msra.mxu0 %v282
    %844 = vmatprep.subr.mxu0 %v287
    %845 = vmatpush1.msra.mxu0 %v286
    %846 = vmatprep.subr.mxu0 %v291
    %847 = vmatpush1.msra.mxu0 %v290
    %848 = vmatprep.subr.mxu0 %v295
    %849 = vmatpush1.msra.mxu0 %v294
    %850 = vmatprep.subr.mxu0 %v299
    %851 = vmatpush1.msra.mxu0 %v298
    %852 = vmatprep.subr.mxu0 %v303
    %853 = vmatpush1.msra.mxu0 %v302
    %854 = vmatprep.subr.mxu0 %v307
    %855 = vmatpush1.msra.mxu0 %v306
    %856 = vmatprep.subr.mxu0 %v311
    %857 = vmatpush1.msra.mxu0 %v310
    %858 = vmatprep.subr.mxu0 %v315
    %859 = vmatpush1.msra.mxu0 %v314
    %860 = vmatprep.subr.mxu0 %v319
    %861 = vmatpush1.msra.mxu0 %v318
    %862 = vmatprep.subr.mxu0 %v323
    %863 = vmatpush1.msra.mxu0 %v322
    %864 = vmatprep.subr.mxu0 %v327
    %865 = vmatpush1.msra.mxu0 %v326
    %866 = vmatprep.subr.mxu0 %v331
    %867 = vmatpush1.msra.mxu0 %v330
    %868 = vmatprep.subr.mxu0 %v335
    %869 = vmatpush1.msra.mxu0 %v334
    %870 = vmatprep.subr.mxu0 %v339
    %871 = vmatpush1.msra.mxu0 %v338
    %872 = vmatprep.subr.mxu0 %v343
    %873 = vmatpush1.msra.mxu0 %v342
    %874 = vmatprep.subr.mxu0 %v347
    %875 = vmatpush1.msra.mxu0 %v346
    %876 = vmatprep.subr.mxu0 %v351
    %877 = vmatpush1.msra.mxu0 %v350
    %878 = vmatprep.subr.mxu0 %v355
    %879 = vmatpush1.msra.mxu0 %v354
    %880 = vmatprep.subr.mxu0 %v359
    %881 = vmatpush1.msra.mxu0 %v358
    %882 = vmatprep.subr.mxu0 %v363
    %883 = vmatpush1.msra.mxu0 %v362
    %884 = vmatprep.subr.mxu0 %v367
    %885 = vmatpush1.msra.mxu0 %v366
    %886 = vmatprep.subr.mxu0 %v371
    %887 = vmatpush1.msra.mxu0 %v370
    %888 = vmatprep.subr.mxu0 %v375
    %889 = vmatpush1.msra.mxu0 %v374
    %890 = vmatprep.subr.mxu0 %v379
    %891 = vmatpush1.msra.mxu0 %v378
    %892 = vmatprep.subr.mxu0 %v383
    %893 = vmatpush1.msra.mxu0 %v382
    %894 = vmatprep.subr.mxu0 %v387
    %895 = vmatpush1.msra.mxu0 %v386
    %896 = vmatprep.mubr.f32.mxu0 %v123
    %897 = vmatmul.mubr.f32.gmra.mrb[0].mxu0 %v122
    %v898 = vpop.f32.mrb[0].mxu0
    %v899 = vadd.f32 %v822, %v898
    %v900 = vpop.f32.mrb[0].mxu0
    %v901 = vadd.f32 %v824, %v900
    %902 = vmatprep.mubr.f32.mxu0 %v129
    %903 = vmatmul.mubr.f32.gmra.mrb[0].mxu0 %v128
    %v904 = vpop.f32.mrb[0].mxu0
    %v905 = vadd.f32 %v828, %v904
    %v906 = vpop.f32.mrb[0].mxu0
    %v907 = vadd.f32 %v830, %v906
    %908 = vdwg.mxu0
    %909 = vmatprep.subr.mxu0 %v391
    %910 = vmatpush1.msra.mxu0 %v390
    %911 = vmatprep.subr.mxu0 %v395
    %912 = vmatpush1.msra.mxu0 %v394
    %913 = vmatprep.subr.mxu0 %v399
    %914 = vmatpush1.msra.mxu0 %v398
    %915 = vmatprep.subr.mxu0 %v403
    %916 = vmatpush1.msra.mxu0 %v402
    %917 = vmatprep.subr.mxu0 %v407
    %918 = vmatpush1.msra.mxu0 %v406
    %919 = vmatprep.subr.mxu0 %v411
    %920 = vmatpush1.msra.mxu0 %v410
    %921 = vmatprep.subr.mxu0 %v415
    %922 = vmatpush1.msra.mxu0 %v414
    %923 = vmatprep.subr.mxu0 %v419
    %924 = vmatpush1.msra.mxu0 %v418
    %925 = vmatprep.subr.mxu0 %v423
    %926 = vmatpush1.msra.mxu0 %v422
    %927 = vmatprep.subr.mxu0 %v427
    %928 = vmatpush1.msra.mxu0 %v426
    %929 = vmatprep.subr.mxu0 %v431
    %930 = vmatpush1.msra.mxu0 %v430
    %931 = vmatprep.subr.mxu0 %v435
    %932 = vmatpush1.msra.mxu0 %v434
    %933 = vmatprep.subr.mxu0 %v439
    %934 = vmatpush1.msra.mxu0 %v438
    %935 = vmatprep.subr.mxu0 %v443
    %936 = vmatpush1.msra.mxu0 %v442
    %937 = vmatprep.subr.mxu0 %v447
    %938 = vmatpush1.msra.mxu0 %v446
    %939 = vmatprep.subr.mxu0 %v451
    %940 = vmatpush1.msra.mxu0 %v450
    %941 = vmatprep.subr.mxu0 %v455
    %942 = vmatpush1.msra.mxu0 %v454
    %943 = vmatprep.subr.mxu0 %v459
    %944 = vmatpush1.msra.mxu0 %v458
    %945 = vmatprep.subr.mxu0 %v463
    %946 = vmatpush1.msra.mxu0 %v462
    %947 = vmatprep.subr.mxu0 %v467
    %948 = vmatpush1.msra.mxu0 %v466
    %949 = vmatprep.subr.mxu0 %v471
    %950 = vmatpush1.msra.mxu0 %v470
    %951 = vmatprep.subr.mxu0 %v475
    %952 = vmatpush1.msra.mxu0 %v474
    %953 = vmatprep.subr.mxu0 %v479
    %954 = vmatpush1.msra.mxu0 %v478
    %955 = vmatprep.subr.mxu0 %v483
    %956 = vmatpush1.msra.mxu0 %v482
    %957 = vmatprep.subr.mxu0 %v487
    %958 = vmatpush1.msra.mxu0 %v486
    %959 = vmatprep.subr.mxu0 %v491
    %960 = vmatpush1.msra.mxu0 %v490
    %961 = vmatprep.subr.mxu0 %v495
    %962 = vmatpush1.msra.mxu0 %v494
    %963 = vmatprep.subr.mxu0 %v499
    %964 = vmatpush1.msra.mxu0 %v498
    %965 = vmatprep.subr.mxu0 %v503
    %966 = vmatpush1.msra.mxu0 %v502
    %967 = vmatprep.subr.mxu0 %v507
    %968 = vmatpush1.msra.mxu0 %v506
    %969 = vmatprep.subr.mxu0 %v511
    %970 = vmatpush1.msra.mxu0 %v510
    %971 = vmatprep.subr.mxu0 %v515
    %972 = vmatpush1.msra.mxu0 %v514
    %973 = vmatprep.mubr.f32.mxu0 %v125
    %974 = vmatmul.mubr.f32.gmra.mrb[0].mxu0 %v124
    %v975 = vpop.f32.mrb[0].mxu0
    %v976 = vadd.f32 %v899, %v975
    %v977 = vpop.f32.mrb[0].mxu0
    %v978 = vadd.f32 %v901, %v977
    %979 = vmatprep.mubr.f32.mxu0 %v131
    %980 = vmatmul.mubr.f32.gmra.mrb[0].mxu0 %v130
    %v981 = vpop.f32.mrb[0].mxu0
    %v982 = vadd.f32 %v905, %v981
    %v983 = vpop.f32.mrb[0].mxu0
    %v984 = vadd.f32 %v907, %v983
    %985 = vdwg.mxu0
    %v986 = vadd.f32 %v516, %v745
    %v987 = vadd.f32 %v517, %v747
    %v988 = vadd.f32 %v518, %v976
    %v989 = vadd.f32 %v519, %v978
    %v990 = vadd.f32 %v520, %v751
    %v991 = vadd.f32 %v521, %v753
    %v992 = vadd.f32 %v522, %v982
    %v993 = vadd.f32 %v523, %v984
    %994 = vst [vmem:[#allocation2] sm:$0xff] %v986
    %995 = vst [vmem:[#allocation2 + $0x8] sm:$0xff] %v987
    %996 = vst [vmem:[#allocation2 + $0x10] sm:$0xff] %v988
    %997 = vst [vmem:[#allocation2 + $0x18] sm:$0xff] %v989
    %998 = vst [vmem:[#allocation2 + $0x20] sm:$0xff] %v990
    %999 = vst [vmem:[#allocation2 + $0x28] sm:$0xff] %v991
    %1000 = vst [vmem:[#allocation2 + $0x30] sm:$0xff] %v992
    %1001 = vst [vmem:[#allocation2 + $0x38] sm:$0xff] %v993
    // Predicated region
    $region14: #{_run.1} parent=1 // pred_check
      %p1002 = pneg %p32
    $region15: #{_run.1} parent=1 // pred_check_branch
      %1004 = sbr.rel (%p1002) target = $region17
    $region16: #{_run.1} parent=1 // pred_region
      %v1005 = vld [vmem:[#allocation2] sm:$0xff]
      %v1006 = vld [vmem:[#allocation2 + $0x8] sm:$0xff]
      %v1007 = vld [vmem:[#allocation2 + $0x10] sm:$0xff]
      %v1008 = vld [vmem:[#allocation2 + $0x18] sm:$0xff]
      %v1009 = vld [vmem:[#allocation2 + $0x20] sm:$0xff]
      %v1010 = vld [vmem:[#allocation2 + $0x28] sm:$0xff]
      %v1011 = vld [vmem:[#allocation2 + $0x30] sm:$0xff]
      %v1012 = vld [vmem:[#allocation2 + $0x38] sm:$0xff]
      %1013 = vst [vmem:[#allocation3] sm:$0xff] %v1005
      %1014 = vst [vmem:[#allocation3 + $0x8] sm:$0xff] %v1006
      %1015 = vst [vmem:[#allocation3 + $0x10] sm:$0xff] %v1007
      %1016 = vst [vmem:[#allocation3 + $0x18] sm:$0xff] %v1008
      %1017 = vst [vmem:[#allocation3 + $0x20] sm:$0xff] %v1009
      %1018 = vst [vmem:[#allocation3 + $0x28] sm:$0xff] %v1010
      %1019 = vst [vmem:[#allocation3 + $0x30] sm:$0xff] %v1011
      %1020 = vst [vmem:[#allocation3 + $0x38] sm:$0xff] %v1012
    $region17: #{_run.1} parent=1 // pred_fallthru
      _
    // Predicated region
    $region18: #{_run.1} parent=1 // pred_check
      _
    $region19: #{_run.1} parent=1 // pred_check_branch
      %1022 = sbr.rel (0) target = $region21
    $region20: #{_run.1} parent=1 // pred_region
      %s1024 = ssub.s32 1024, 1024
      %1025 = vsyncadd [#allocation4], %s1024
      %s1026 = sshll.u32 [#allocation3], 4
      %s1027 = int_to_ptr.vmem [resolvable:$true] %s1026
      %1032 = dma.vmem_to_hbm [thread:$0]  %s1027, 1024, %s2, [#allocation4], 512, 512, 32
    $region21: #{_run.1} parent=1 // pred_fallthru
      _
    // Predicated region
    $region22: #{_run.1} parent=1 // pred_check
      _
    $region23: #{_run.1} parent=1 // pred_check_branch
      %1034 = sbr.rel (0) target = $region25
    $region24: #{_run.1} parent=1 // pred_region
      %1035 = dma.done [#allocation4], 1024
    $region25: #{_run.1} parent=1 // pred_fallthru
      _
    %1036 = vsyncpa [#allocation4], 1

</llo_original>
